<compile_context>
chip_gen: v6e
topology: v6e:2x2x1
jax: 0.10.0
libtpu: 0.0.40
codegen_flags: <defaults>
</compile_context>

<pallas_src>
import jax
import jax.numpy as jnp
from jax.experimental import pallas as pl
from jax.experimental.pallas import tpu as pltpu


def _round_up(n, m):
    return ((n + m - 1) // m) * m


def critic_kernel(x_ref, w1_ref, b1_ref, w2_ref, b2_ref, o_ref):
    # In-kernel cast of x to the MXU operand dtype (VPU slack is free; keeps
    # x HBM traffic at its native width -- no wrapper-side cast pass).
    x = x_ref[...].astype(w1_ref.dtype)
    # First linear layer (MXU matmul, f32 accumulation).
    h = jnp.dot(x, w1_ref[...], preferred_element_type=jnp.float32)
    h = h + b1_ref[...]                       # (TB, H) + (1, H) broadcast, f32
    # LeakyReLU(negative_slope=0.1): single max instead of compare+select.
    h = jnp.maximum(h, 0.1 * h)
    # Second linear layer; MXU operands in the weight dtype, f32 accumulation.
    y = jnp.dot(h.astype(w2_ref.dtype), w2_ref[...],
                preferred_element_type=jnp.float32)
    y = y + b2_ref[...]                       # (TB, O) + (1, O) broadcast, f32
    o_ref[...] = y.astype(o_ref.dtype)


def prepare_critic_params(w1, b1, w2, b2, *, matmul_dtype=jnp.bfloat16):
    """One-time parameter prep (hoisted out of the per-step forward):
    zero-pad the hidden dim up to a multiple of 128 (lane-dense, numerically
    exact) and cast weights to the MXU operand dtype.  Biases stay f32."""
    hidden = w1.shape[1]
    H = _round_up(hidden, 128)
    if H != hidden:
        w1 = jnp.pad(w1, ((0, 0), (0, H - hidden)))
        b1 = jnp.pad(b1, ((0, 0), (0, H - hidden)))
        w2 = jnp.pad(w2, ((0, H - hidden), (0, 0)))
    return (w1.astype(matmul_dtype), b1.astype(jnp.float32),
            w2.astype(matmul_dtype), b2.astype(jnp.float32))


def _choose_block_batch(B, input_dim, out_dim, x_itemsize, align):
    """Rows per batch tile: ~8 pipeline steps for large batches (but >=512-row
    tiles so per-step overhead stays negligible), >=2 tiles whenever the batch
    allows (v7x megacore), double-buffered x/out tiles capped by a conservative
    VMEM budget that fits v7x's 64 MiB per TensorCore."""
    tile_budget = 16 * 1024 * 1024                       # streamed-tile budget
    bytes_per_row = 2 * (input_dim * x_itemsize + out_dim * 4)
    tb_vmem = max(align, tile_budget // bytes_per_row)
    tb = max(pl.cdiv(B, 8), 512)                         # ~8 steps, >=512 rows
    tb = min(tb, _round_up(pl.cdiv(B, 2), align))        # >=2 tiles if possible
    tb = min(tb, tb_vmem, 1024)
    tb = max(tb, align)
    return _round_up(tb, align)


def critic_forward(x, w1, b1, w2, b2, *, block_batch=None):
    """x: (B, input_dim); w1: (input_dim, H); b1: (1, H); w2: (H, out_dim);
    b2: (1, out_dim) -> (B, out_dim) float32.  Run params through
    prepare_critic_params once; an un-prepped hidden dim is handled as a
    (slower) fallback that re-pads every call."""
    B, input_dim = x.shape
    out_dim = w2.shape[1]
    if w1.shape[1] % 128 != 0:
        # Fallback path; prefer calling prepare_critic_params once up front.
        w1, b1, w2, b2 = prepare_critic_params(w1, b1, w2, b2,
                                               matmul_dtype=w1.dtype)
    H = w1.shape[1]

    x_itemsize = jnp.dtype(x.dtype).itemsize
    w_itemsize = jnp.dtype(w1.dtype).itemsize
    # Sublane alignment of the streamed batch tiles follows the x dtype
    # (f32 -> 8, bf16 -> 16, int8/fp8 -> 32).
    align = max(8, 32 // min(x_itemsize, 4))
    TB = block_batch if block_batch is not None else _choose_block_batch(
        B, input_dim, out_dim, x_itemsize, align)
    TB = _round_up(TB, align)
    grid = (pl.cdiv(B, TB),)

    # Explicit VMEM limit: estimated usage (double-buffered x/out tiles,
    # default-double-buffered resident weights, f32 h intermediate + cast
    # copies) with 2x headroom, clamped to [32 MiB, 64 MiB] -- above v5e's
    # 16 MiB default scoped limit, within v7x's 64 MiB physical per TC.
    est_vmem = (2 * TB * input_dim * x_itemsize              # x tiles
                + 2 * TB * out_dim * 4                       # out tiles
                + 2 * (input_dim + out_dim) * H * w_itemsize # w1 + w2 (2x buf)
                + 4 * (H + out_dim) * 4                      # biases
                + TB * H * (4 + w_itemsize)                  # h f32 + cast copy
                + TB * input_dim * w_itemsize)               # in-kernel x cast
    vmem_limit = int(min(64 * 1024 * 1024,
                         max(32 * 1024 * 1024, 2 * est_vmem)))

    cost = pl.CostEstimate(
        flops=2 * B * (input_dim * H + H * out_dim),
        transcendentals=0,
        bytes_accessed=(B * input_dim * x_itemsize           # x (read once)
                        + (input_dim + out_dim) * H * w_itemsize
                        + (H + out_dim) * 4                  # biases
                        + B * out_dim * 4))                  # output

    return pl.pallas_call(
        critic_kernel,
        out_shape=jax.ShapeDtypeStruct((B, out_dim), jnp.float32),
        grid_spec=pl.GridSpec(
            grid=grid,
            in_specs=[
                pl.BlockSpec((TB, input_dim), lambda i: (i, 0)),   # x tile
                pl.BlockSpec((input_dim, H), lambda i: (0, 0)),    # w1 resident
                pl.BlockSpec((1, H), lambda i: (0, 0)),            # b1 resident
                pl.BlockSpec((H, out_dim), lambda i: (0, 0)),      # w2 resident
                pl.BlockSpec((1, out_dim), lambda i: (0, 0)),      # b2 resident
            ],
            out_specs=pl.BlockSpec((TB, out_dim), lambda i: (i, 0)),
        ),
        compiler_params=pltpu.CompilerParams(
            # Independent batch tiles -> shard across v7x's 2 TensorCores.
            dimension_semantics=("parallel",),
            vmem_limit_bytes=vmem_limit,
        ),
        cost_estimate=cost,
    )(x, w1, b1, w2, b2)


def init_critic_params(key, input_dim, out_dim, hidden_dim=100):
    """Deterministic init mimicking PyTorch nn.Linear defaults
    (uniform(-1/sqrt(fan_in), 1/sqrt(fan_in)))."""
    k1, k2, k3, k4 = jax.random.split(key, 4)
    lim1 = 1.0 / jnp.sqrt(float(input_dim))
    lim2 = 1.0 / jnp.sqrt(float(hidden_dim))
    w1 = jax.random.uniform(k1, (input_dim, hidden_dim), jnp.float32, -lim1, lim1)
    b1 = jax.random.uniform(k2, (1, hidden_dim), jnp.float32, -lim1, lim1)
    w2 = jax.random.uniform(k3, (hidden_dim, out_dim), jnp.float32, -lim2, lim2)
    b2 = jax.random.uniform(k4, (1, out_dim), jnp.float32, -lim2, lim2)
    return w1, b1, w2, b2


if __name__ == "__main__":
    # Small shapes consistent with Critic(input_dim=32, out_dim=4, hidden=100).
    # batch=50 exercises both multiple grid tiles and the ragged last tile.
    batch, input_dim, hidden_dim, out_dim = 50, 32, 100, 4

    key = jax.random.PRNGKey(0)
    kx, kp = jax.random.split(key)
    x = jax.random.normal(kx, (batch, input_dim), jnp.float32)
    w1, b1, w2, b2 = init_critic_params(kp, input_dim, out_dim, hidden_dim)

    # Pure-JAX reference of the forward semantics.
    h_ref = x @ w1 + b1
    h_ref = jnp.where(h_ref > 0, h_ref, 0.1 * h_ref)
    ref = h_ref @ w2 + b2

    # Strict f32 MXU path: must match the reference tightly.
    p32 = prepare_critic_params(w1, b1, w2, b2, matmul_dtype=jnp.float32)
    out_f32 = jax.block_until_ready(critic_forward(x, *p32))
    assert out_f32.shape == (batch, out_dim)
    assert jnp.allclose(out_f32, ref, atol=1e-5, rtol=1e-5)

    # Default bf16 MXU path (f32 accumulation): loose tolerance.
    pbf = prepare_critic_params(w1, b1, w2, b2)          # bf16 default
    out_bf16 = jax.block_until_ready(critic_forward(x, *pbf))
    assert out_bf16.shape == (batch, out_dim)
    assert jnp.allclose(out_bf16, ref, atol=5e-2, rtol=5e-2)

    print("KERNEL_OK")
</pallas_src>

<mosaic_0001>
module attributes {stable_mosaic.version = 11 : i64} {
  func.func @critic_kernel(%arg0: i32, %arg1: memref<32x32xf32, #tpu.memory_space<vmem>>, %arg2: memref<32x128xf32, #tpu.memory_space<vmem>>, %arg3: memref<1x128xf32, #tpu.memory_space<vmem>>, %arg4: memref<128x4xf32, #tpu.memory_space<vmem>>, %arg5: memref<1x4xf32, #tpu.memory_space<vmem>>, %arg6: memref<32x4xf32, #tpu.memory_space<vmem>>) attributes {dimension_semantics = [#tpu.dimension_semantics<parallel>], iteration_bounds = array<i64: 2>, scalar_prefetch = 0 : i64, scratch_operands = 0 : i64, tpu.core_type = #tpu.core_type<tc>, window_params = [{transform_indices = @transform_0, window_bounds = array<i64: 32, 32>}, {pipeline_mode = #tpu.pipeline_mode<synchronous>, transform_indices = @transform_1, window_bounds = array<i64: 32, 128>}, {pipeline_mode = #tpu.pipeline_mode<synchronous>, transform_indices = @transform_2, window_bounds = array<i64: 1, 128>}, {pipeline_mode = #tpu.pipeline_mode<synchronous>, transform_indices = @transform_3, window_bounds = array<i64: 128, 4>}, {pipeline_mode = #tpu.pipeline_mode<synchronous>, transform_indices = @transform_4, window_bounds = array<i64: 1, 4>}, {transform_indices = @transform_5, window_bounds = array<i64: 32, 4>}]} {
    %c0 = arith.constant 0 : index
    %c0_0 = arith.constant 0 : index
    %0 = vector.load %arg1[%c0, %c0_0] : memref<32x32xf32, #tpu.memory_space<vmem>>, vector<32x32xf32>
    %c0_1 = arith.constant 0 : index
    %c0_2 = arith.constant 0 : index
    %1 = vector.load %arg2[%c0_1, %c0_2] : memref<32x128xf32, #tpu.memory_space<vmem>>, vector<32x128xf32>
    %cst = arith.constant dense<0.000000e+00> : vector<32x128xf32>
    %2 = tpu.matmul %0, %1, %cst {dimension_numbers = #tpu.dot_dimension_numbers<[1], [0], [0], [1], [0, 0, 1, 1], [], []>} : vector<32x32xf32>, vector<32x128xf32>, vector<32x128xf32> -> vector<32x128xf32>
    %c0_3 = arith.constant 0 : index
    %c0_4 = arith.constant 0 : index
    %3 = vector.load %arg3[%c0_3, %c0_4] : memref<1x128xf32, #tpu.memory_space<vmem>>, vector<1x128xf32>
    %4 = vector.broadcast %3 : vector<1x128xf32> to vector<32x128xf32>
    %5 = arith.addf %2, %4 : vector<32x128xf32>
    %cst_5 = arith.constant 1.000000e-01 : f32
    %6 = vector.broadcast %cst_5 : f32 to vector<32x128xf32>
    %7 = arith.mulf %6, %5 : vector<32x128xf32>
    %8 = arith.maximumf %5, %7 : vector<32x128xf32>
    %c0_6 = arith.constant 0 : index
    %c0_7 = arith.constant 0 : index
    %9 = vector.load %arg4[%c0_6, %c0_7] : memref<128x4xf32, #tpu.memory_space<vmem>>, vector<128x4xf32>
    %cst_8 = arith.constant dense<0.000000e+00> : vector<32x4xf32>
    %10 = tpu.matmul %8, %9, %cst_8 {dimension_numbers = #tpu.dot_dimension_numbers<[1], [0], [0], [1], [0, 0, 1, 1], [], []>} : vector<32x128xf32>, vector<128x4xf32>, vector<32x4xf32> -> vector<32x4xf32>
    %c0_9 = arith.constant 0 : index
    %c0_10 = arith.constant 0 : index
    %11 = vector.load %arg5[%c0_9, %c0_10] : memref<1x4xf32, #tpu.memory_space<vmem>>, vector<1x4xf32>
    %12 = vector.broadcast %11 : vector<1x4xf32> to vector<32x4xf32>
    %13 = arith.addf %10, %12 : vector<32x4xf32>
    %c0_11 = arith.constant 0 : index
    %c0_12 = arith.constant 0 : index
    %14 = vector.load %arg6[%c0_11, %c0_12] : memref<32x4xf32, #tpu.memory_space<vmem>>, vector<32x4xf32>
    tpu.vector_store %arg6[%c0_11, %c0_12], %13 {strides = array<i32>} : memref<32x4xf32, #tpu.memory_space<vmem>>, vector<32x4xf32>,
    return
  }
  func.func @transform_0(%arg0: i32) -> (i32, i32) {
    %c0_i32 = arith.constant 0 : i32
    %c0_i32_0 = arith.constant 0 : i32
    return %arg0, %c0_i32 : i32, i32
  }
  func.func @transform_1(%arg0: i32) -> (i32, i32) {
    %c0_i32 = arith.constant 0 : i32
    %c0_i32_0 = arith.constant 0 : i32
    %c0_i32_1 = arith.constant 0 : i32
    return %c0_i32, %c0_i32_0 : i32, i32
  }
  func.func @transform_2(%arg0: i32) -> (i32, i32) {
    %c0_i32 = arith.constant 0 : i32
    %c0_i32_0 = arith.constant 0 : i32
    %c0_i32_1 = arith.constant 0 : i32
    return %c0_i32, %c0_i32_0 : i32, i32
  }
  func.func @transform_3(%arg0: i32) -> (i32, i32) {
    %c0_i32 = arith.constant 0 : i32
    %c0_i32_0 = arith.constant 0 : i32
    %c0_i32_1 = arith.constant 0 : i32
    return %c0_i32, %c0_i32_0 : i32, i32
  }
  func.func @transform_4(%arg0: i32) -> (i32, i32) {
    %c0_i32 = arith.constant 0 : i32
    %c0_i32_0 = arith.constant 0 : i32
    %c0_i32_1 = arith.constant 0 : i32
    return %c0_i32, %c0_i32_0 : i32, i32
  }
  func.func @transform_5(%arg0: i32) -> (i32, i32) {
    %c0_i32 = arith.constant 0 : i32
    %c0_i32_0 = arith.constant 0 : i32
    return %arg0, %c0_i32 : i32, i32
  }
}

</mosaic_0001>

<llo_original>
// kernel: tpu_custom_call.1
$region0: #{tpu_custom_call.1}
  #allocation0 [shape = 'u32[]', space=smem, size = 0x4, offset = 0x4, fixed_abs, tag = 'smem constant byte address 0x4 - core index']
  #allocation1 [shape = 'u32[144,128]{1,0:T(1,128)}', space=vmem, size = 0x12000, scoped, tag = 'internal scratch']
  %s0 = inlined_call_operand.vmem [shape: f32[50,32], index: 0, kind: input, shape index: {}]
  %s1 = inlined_call_operand.vmem [shape: f32[32,128], index: 1, kind: input, shape index: {}]
  %s2 = inlined_call_operand.vmem [shape: f32[1,128], index: 2, kind: input, shape index: {}]
  %s3 = inlined_call_operand.vmem [shape: f32[128,4], index: 3, kind: input, shape index: {}]
  %s4 = inlined_call_operand.vmem [shape: f32[1,4], index: 4, kind: input, shape index: {}]
  %s5 = inlined_call_operand.vmem [shape: f32[50,4], index: 5, kind: output, shape index: {}]
  %s6 = sld [smem:[#allocation0]]
  $region101: #{tpu_custom_call.1} parent=0
    _
  %s8 = ssub.s32 1, %s6
  %s9 = scalar_select 0, %s8, %s6
  $region1: #{tpu_custom_call.1} parent=0
    #allocation2 [shape = 'u8[32768]{0}', space=vmem, size = 0x8000, scoped, tag = 'output window, operand 0']
    loop: start=0, step=1, limit=4
    $region2: #{tpu_custom_call.1} parent=1 // loop_pre_header
      _
    $region3: #{tpu_custom_call.1} parent=1 // loop_header
      %s11 = sphi 0, %s15
      %p12 = scmp.ge.s32.totalorder %s11, 4
      %s21 = sphi 0, %s23
      %s24 = sphi 0, %s21
      %s25 = sphi 0, %s24
      %s41 = sphi 0, %s25
      %s45 = sphi 0, %s45
      %s47 = sphi 0, %s45
      %s48 = sphi 0, %s47
      %s62 = sphi 0, %s48
      %s66 = sphi 0, %s66
      %s68 = sphi 0, %s66
      %s69 = sphi 0, %s68
      %s83 = sphi 0, %s69
      %s87 = sphi 0, %s87
      %s89 = sphi 0, %s87
      %s90 = sphi 0, %s89
      %s104 = sphi 0, %s90
      %s108 = sphi 0, %s108
      %s110 = sphi 0, %s108
      %s111 = sphi 0, %s110
      %s125 = sphi 0, %s111
      %s131 = sphi 0, %s133
      %s134 = sphi 0, %s131
      %s135 = sphi 0, %s134
      %s151 = sphi 0, %s135
    $region4: #{tpu_custom_call.1} parent=1 // loop_header_branch
      %14 = sbr.rel (%p12) target = $region8
    $region5: #{tpu_custom_call.1} parent=1 // loop_body
      %s16 = ssub.s32 %s11, 1
      %s17 = ssub.s32 %s11, 2
      %s18 = sadd.s32 %s11, 1
      %s19 = ssub.s32 %s11, %s18
      %p20 = scmp.eq.s32.totalorder %s19, 0
      %s22 = sadd.s32 %s21, 1
      %s23 = scalar_select %p20, %s21, %s22
      %p26 = pneg %p20
      %p27 = scmp.eq.s32.totalorder %s11, 1
      %p28 = por %p26, %p27
      %p29 = scmp.ne.s32.totalorder %s21, %s24
      %p30 = scmp.eq.s32.totalorder %s11, 0
      %p31 = por %p29, %p30
      %p32 = scmp.ne.s32.totalorder %s21, %s24
      %p33 = scmp.eq.s32.totalorder %s16, 1
      %p34 = por %p32, %p33
      %p35 = scmp.ne.s32.totalorder %s24, %s25
      %p36 = scmp.eq.s32.totalorder %s16, 0
      %p37 = por %p35, %p36
      %p38 = scmp.ne.s32.totalorder %s24, %s25
      %p39 = scmp.eq.s32.totalorder %s17, 1
      %p40 = por %p38, %p39
      %p42 = scmp.ne.s32.totalorder %s25, %s41
      %p43 = scmp.eq.s32.totalorder %s17, 0
      %p44 = por %p42, %p43
      %s46 = sadd.s32 %s45, 1
      %p49 = scmp.eq.s32.totalorder %s11, 1
      %p50 = scmp.ne.s32.totalorder %s45, %s47
      %p51 = scmp.eq.s32.totalorder %s11, 0
      %p52 = por %p50, %p51
      %p53 = scmp.ne.s32.totalorder %s45, %s47
      %p54 = scmp.eq.s32.totalorder %s16, 1
      %p55 = por %p53, %p54
      %p56 = scmp.ne.s32.totalorder %s47, %s48
      %p57 = scmp.eq.s32.totalorder %s16, 0
      %p58 = por %p56, %p57
      %p59 = scmp.ne.s32.totalorder %s47, %s48
      %p60 = scmp.eq.s32.totalorder %s17, 1
      %p61 = por %p59, %p60
      %p63 = scmp.ne.s32.totalorder %s48, %s62
      %p64 = scmp.eq.s32.totalorder %s17, 0
      %p65 = por %p63, %p64
      %s67 = sadd.s32 %s66, 1
      %p70 = scmp.eq.s32.totalorder %s11, 1
      %p71 = scmp.ne.s32.totalorder %s66, %s68
      %p72 = scmp.eq.s32.totalorder %s11, 0
      %p73 = por %p71, %p72
      %p74 = scmp.ne.s32.totalorder %s66, %s68
      %p75 = scmp.eq.s32.totalorder %s16, 1
      %p76 = por %p74, %p75
      %p77 = scmp.ne.s32.totalorder %s68, %s69
      %p78 = scmp.eq.s32.totalorder %s16, 0
      %p79 = por %p77, %p78
      %p80 = scmp.ne.s32.totalorder %s68, %s69
      %p81 = scmp.eq.s32.totalorder %s17, 1
      %p82 = por %p80, %p81
      %p84 = scmp.ne.s32.totalorder %s69, %s83
      %p85 = scmp.eq.s32.totalorder %s17, 0
      %p86 = por %p84, %p85
      %s88 = sadd.s32 %s87, 1
      %p91 = scmp.eq.s32.totalorder %s11, 1
      %p92 = scmp.ne.s32.totalorder %s87, %s89
      %p93 = scmp.eq.s32.totalorder %s11, 0
      %p94 = por %p92, %p93
      %p95 = scmp.ne.s32.totalorder %s87, %s89
      %p96 = scmp.eq.s32.totalorder %s16, 1
      %p97 = por %p95, %p96
      %p98 = scmp.ne.s32.totalorder %s89, %s90
      %p99 = scmp.eq.s32.totalorder %s16, 0
      %p100 = por %p98, %p99
      %p101 = scmp.ne.s32.totalorder %s89, %s90
      %p102 = scmp.eq.s32.totalorder %s17, 1
      %p103 = por %p101, %p102
      %p105 = scmp.ne.s32.totalorder %s90, %s104
      %p106 = scmp.eq.s32.totalorder %s17, 0
      %p107 = por %p105, %p106
      %s109 = sadd.s32 %s108, 1
      %p112 = scmp.eq.s32.totalorder %s11, 1
      %p113 = scmp.ne.s32.totalorder %s108, %s110
      %p114 = scmp.eq.s32.totalorder %s11, 0
      %p115 = por %p113, %p114
      %p116 = scmp.ne.s32.totalorder %s108, %s110
      %p117 = scmp.eq.s32.totalorder %s16, 1
      %p118 = por %p116, %p117
      %p119 = scmp.ne.s32.totalorder %s110, %s111
      %p120 = scmp.eq.s32.totalorder %s16, 0
      %p121 = por %p119, %p120
      %p122 = scmp.ne.s32.totalorder %s110, %s111
      %p123 = scmp.eq.s32.totalorder %s17, 1
      %p124 = por %p122, %p123
      %p126 = scmp.ne.s32.totalorder %s111, %s125
      %p127 = scmp.eq.s32.totalorder %s17, 0
      %p128 = por %p126, %p127
      %s129 = ssub.s32 %s11, %s18
      %p130 = scmp.eq.s32.totalorder %s129, 0
      %s132 = sadd.s32 %s131, 1
      %s133 = scalar_select %p130, %s131, %s132
      %p136 = pneg %p130
      %p137 = scmp.eq.s32.totalorder %s11, 1
      %p138 = por %p136, %p137
      %p139 = scmp.ne.s32.totalorder %s131, %s134
      %p140 = scmp.eq.s32.totalorder %s11, 0
      %p141 = por %p139, %p140
      %p142 = scmp.ne.s32.totalorder %s131, %s134
      %p143 = scmp.eq.s32.totalorder %s16, 1
      %p144 = por %p142, %p143
      %p145 = scmp.ne.s32.totalorder %s134, %s135
      %p146 = scmp.eq.s32.totalorder %s16, 0
      %p147 = por %p145, %p146
      %p148 = scmp.ne.s32.totalorder %s134, %s135
      %p149 = scmp.eq.s32.totalorder %s17, 1
      %p150 = por %p148, %p149
      %p152 = scmp.ne.s32.totalorder %s135, %s151
      %p153 = scmp.eq.s32.totalorder %s17, 0
      %p154 = por %p152, %p153
      %p155 = scmp.le.s32.totalorder 1, %s11
      %p156 = scmp.lt.s32.totalorder %s11, 3
      %p157 = pnand %p155, %p156
      %p158 = pneg %p157
      // Predicated region
      $region9: #{tpu_custom_call.1} parent=5 // pred_check
        _
      $region10: #{tpu_custom_call.1} parent=5 // pred_check_branch
        %160 = sbr.rel (%p157) target = $region12
      $region11: #{tpu_custom_call.1} parent=5 // pred_region
        %s161 = ssub.s32 %s11, 1
        // Predicated region
        $region13: #{tpu_custom_call.1} parent=11 // pred_check
          %p162 = pneg %p58
        $region14: #{tpu_custom_call.1} parent=11 // pred_check_branch
          %164 = sbr.rel (%p162) target = $region16
        $region15: #{tpu_custom_call.1} parent=11 // pred_region
          _
        $region16: #{tpu_custom_call.1} parent=11 // pred_fallthru
          _
        // Predicated region
        $region17: #{tpu_custom_call.1} parent=11 // pred_check
          %p165 = pneg %p79
        $region18: #{tpu_custom_call.1} parent=11 // pred_check_branch
          %167 = sbr.rel (%p165) target = $region20
        $region19: #{tpu_custom_call.1} parent=11 // pred_region
          _
        $region20: #{tpu_custom_call.1} parent=11 // pred_fallthru
          _
        // Predicated region
        $region21: #{tpu_custom_call.1} parent=11 // pred_check
          %p168 = pneg %p100
        $region22: #{tpu_custom_call.1} parent=11 // pred_check_branch
          %170 = sbr.rel (%p168) target = $region24
        $region23: #{tpu_custom_call.1} parent=11 // pred_region
          _
        $region24: #{tpu_custom_call.1} parent=11 // pred_fallthru
          _
        // Predicated region
        $region25: #{tpu_custom_call.1} parent=11 // pred_check
          %p171 = pneg %p121
        $region26: #{tpu_custom_call.1} parent=11 // pred_check_branch
          %173 = sbr.rel (%p171) target = $region28
        $region27: #{tpu_custom_call.1} parent=11 // pred_region
          _
        $region28: #{tpu_custom_call.1} parent=11 // pred_fallthru
          _
      $region12: #{tpu_custom_call.1} parent=5 // pred_fallthru
        _
      %p174 = scmp.lt.s32.totalorder %s11, 2
      // Predicated region
      $region29: #{tpu_custom_call.1} parent=5 // pred_check
        %p175 = pneg %p174
      $region30: #{tpu_custom_call.1} parent=5 // pred_check_branch
        %177 = sbr.rel (%p175) target = $region32
      $region31: #{tpu_custom_call.1} parent=5 // pred_region
        // Predicated region
        $region33: #{tpu_custom_call.1} parent=31 // pred_check
          %p178 = pneg %p31
        $region34: #{tpu_custom_call.1} parent=31 // pred_check_branch
          %180 = sbr.rel (%p178) target = $region36
        $region35: #{tpu_custom_call.1} parent=31 // pred_region
          %s181 = smul.u32 4, %s11
          %s182 = ssub.s32 7, %s181
          %p183 = scmp.lt.s32.totalorder %s182, 4
          %s184 = scalar_select %p183, %s182, 4
          %s185 = smul.u32 128, %s184
          %p186 = scmp.lt.s32.totalorder %s181, 6
          %s187 = scalar_select %p186, %s181, 6
          %s188 = smul.addr %s187, 8
          %s189 = scalar_lea.vmem %s0, %s188
          %s190 = smul.u32 4, %s11
          %s191 = ssub.s32 7, %s190
          %p192 = scmp.lt.s32.totalorder %s191, 4
          %s193 = scalar_select %p192, %s191, 4
          %s194 = smul.u32 128, %s193
        $region36: #{tpu_custom_call.1} parent=31 // pred_fallthru
          _
      $region32: #{tpu_custom_call.1} parent=5 // pred_fallthru
        _
      %p195 = scmp.le.s32.totalorder 1, %s11
      %p196 = scmp.lt.s32.totalorder %s11, 3
      %p197 = pnand %p195, %p196
      %p198 = pneg %p197
      // Predicated region
      $region37: #{tpu_custom_call.1} parent=5 // pred_check
        _
      $region38: #{tpu_custom_call.1} parent=5 // pred_check_branch
        %200 = sbr.rel (%p197) target = $region40
      $region39: #{tpu_custom_call.1} parent=5 // pred_region
        %s201 = ssub.s32 %s11, 1
        %s202 = smul.u32 4, %s16
        %s203 = ssub.s32 7, %s202
        %p204 = scmp.lt.s32.totalorder %s203, 4
        %s205 = scalar_select %p204, %s203, 4
        %s206 = smul.u32 128, %s205
        %p207 = scmp.lt.s32.totalorder %s202, 6
        %s208 = scalar_select %p207, %s202, 6
        %s209 = smul.addr %s208, 8
        %s210 = scalar_lea.vmem %s0, %s209
        %p211 = pneg %p37
        %p212 = pneg %p34
        %p213 = pneg %p58
        %p214 = pneg %p55
        %p215 = pneg %p79
        %p216 = pneg %p76
        %p217 = pneg %p100
        %p218 = pneg %p97
        %p219 = pneg %p121
        %p220 = pneg %p118
        %p221 = pneg %p147
        %p222 = pneg %p144
        %s223 = sand.u32 %s134, 1
        %s224 = sand.u32 %s134, 1
        %s225 = smul.addr %s224, 32
        %s226 = scalar_lea.vmem [#allocation2], %s225
        %s227 = smul.u32 4, %s16
        %s228 = ssub.s32 7, %s227
        %p229 = scmp.lt.s32.totalorder %s228, 4
        %s230 = scalar_select %p229, %s228, 4
        %s231 = smul.u32 128, %s230
        %p232 = scmp.lt.s32.totalorder %s227, 6
        %s233 = scalar_select %p232, %s227, 6
        %s234 = smul.addr %s233, 8
        %s235 = scalar_lea.vmem %s0, %s234
        %s236 = smul.u32 4, %s16
        %s237 = ssub.s32 7, %s236
        %p238 = scmp.lt.s32.totalorder %s237, 4
        %s239 = scalar_select %p238, %s237, 4
        %s240 = smul.u32 128, %s239
        %s241 = smul.u32 4, %s16
        %s242 = ssub.s32 7, %s241
        %p243 = scmp.lt.s32.totalorder %s242, 4
        %s244 = scalar_select %p243, %s242, 4
        %s245 = smul.u32 128, %s244
        %v246 = vld [vmem:[%s235] sm:$0xff]
        %v247 = vld [vmem:[%s235 + $0x8] sm:$0xff]
        %v248 = vld [vmem:[%s235 + $0x10] sm:$0xff]
        %v249 = vld [vmem:[%s235 + $0x18] sm:$0xff]
        %v250 = vld [vmem:[%s1] sm:$0xff]
        %v251 = vld [vmem:[%s1 + $0x8] sm:$0xff]
        %v252 = vld [vmem:[%s1 + $0x10] sm:$0xff]
        %v253 = vld [vmem:[%s1 + $0x18] sm:$0xff]
        %v254 = vld [vmem:[%s2] sm:$0x1]
        %v256 = vlaneseq
        %v257 = vshrl.u32 %v256, 7
        %v258 = vsub.s32 0, %v257
        %v259 = vrot.slane %v254, %v258
        %vm261 = vcmask 261120
        %v263 = vsel %vm261, %v246, 0
        %v266 = vsel %vm261, %v247, 0
        %v269 = vsel %vm261, %v248, 0
        %v272 = vsel %vm261, %v249, 0
        %274 = vmatprep.subr.mxu0 0.0
        %275 = vmatpush1.msra.mxu0 0.0
        %276 = vmatprep.subr.mxu0 0.0
        %277 = vmatpush1.msra.mxu0 0.0
        %278 = vmatprep.subr.mxu0 0.0
        %279 = vmatpush1.msra.mxu0 0.0
        %280 = vmatprep.subr.mxu0 0.0
        %281 = vmatpush1.msra.mxu0 0.0
        %282 = vmatprep.subr.mxu0 0.0
        %283 = vmatpush1.msra.mxu0 0.0
        %284 = vmatprep.subr.mxu0 0.0
        %285 = vmatpush1.msra.mxu0 0.0
        %286 = vmatprep.subr.mxu0 0.0
        %287 = vmatpush1.msra.mxu0 0.0
        %288 = vmatprep.subr.mxu0 0.0
        %289 = vmatpush1.msra.mxu0 0.0
        %290 = vmatprep.subr.mxu0 0.0
        %291 = vmatpush1.msra.mxu0 0.0
        %292 = vmatprep.subr.mxu0 0.0
        %293 = vmatpush1.msra.mxu0 0.0
        %294 = vmatprep.subr.mxu0 0.0
        %295 = vmatpush1.msra.mxu0 0.0
        %296 = vmatprep.subr.mxu0 0.0
        %297 = vmatpush1.msra.mxu0 0.0
        %298 = vmatprep.subr.mxu0 0.0
        %299 = vmatpush1.msra.mxu0 %v253
        %300 = vmatprep.subr.mxu0 0.0
        %301 = vmatpush1.msra.mxu0 %v252
        %302 = vmatprep.subr.mxu0 0.0
        %303 = vmatpush1.msra.mxu0 %v251
        %304 = vmatprep.subr.mxu0 0.0
        %305 = vmatpush1.msra.mxu0 %v250
        %306 = vmatprep.subr.mxu0 0.0
        %307 = vmatpush2.msra.mxu0 0.0
        %308 = vmatprep.subr.mxu0 0.0
        %309 = vmatpush2.msra.mxu0 0.0
        %310 = vmatprep.subr.mxu0 0.0
        %311 = vmatpush2.msra.mxu0 0.0
        %312 = vmatprep.subr.mxu0 0.0
        %313 = vmatpush2.msra.mxu0 0.0
        %314 = vmatprep.subr.mxu0 0.0
        %315 = vmatpush2.msra.mxu0 0.0
        %316 = vmatprep.subr.mxu0 0.0
        %317 = vmatpush2.msra.mxu0 0.0
        %318 = vmatprep.subr.mxu0 0.0
        %319 = vmatpush2.msra.mxu0 0.0
        %320 = vmatprep.subr.mxu0 0.0
        %321 = vmatpush2.msra.mxu0 0.0
        %322 = vmatprep.subr.mxu0 0.0
        %323 = vmatpush2.msra.mxu0 0.0
        %324 = vmatprep.subr.mxu0 0.0
        %325 = vmatpush2.msra.mxu0 0.0
        %326 = vmatprep.subr.mxu0 0.0
        %327 = vmatpush2.msra.mxu0 0.0
        %328 = vmatprep.subr.mxu0 0.0
        %329 = vmatpush2.msra.mxu0 0.0
        %330 = vmatprep.subr.mxu0 0.0
        %331 = vmatpush2.msra.mxu0 0.0
        %332 = vmatprep.subr.mxu0 0.0
        %333 = vmatpush2.msra.mxu0 0.0
        %334 = vmatprep.subr.mxu0 0.0
        %335 = vmatpush2.msra.mxu0 0.0
        %336 = vmatprep.subr.mxu0 0.0
        %337 = vmatpush2.msra.mxu0 0.0
        %338 = vmatprep.mubr.f32.mxu0 0.0
        %339 = vmatmul.mubr.f32.gmra.mxu0 %v263
        %v340 = vpop.f32.mrf.mxu0
        %v341 = vadd.f32 %v259, %v340
        %v342 = vpop.f32.mrf.mxu0
        %343 = vmatprep.mubr.f32.mxu0 0.0
        %344 = vmatmul.mubr.f32.gmra.mxu0 %v266
        %v345 = vpop.f32.mrf.mxu0
        %v346 = vadd.f32 %v259, %v345
        %v347 = vpop.f32.mrf.mxu0
        %348 = vmatprep.mubr.f32.mxu0 0.0
        %349 = vmatmul.mubr.f32.gmra.mxu0 %v269
        %v350 = vpop.f32.mrf.mxu0
        %v351 = vadd.f32 %v259, %v350
        %v352 = vpop.f32.mrf.mxu0
        %353 = vmatprep.mubr.f32.mxu0 0.0
        %354 = vmatmul.mubr.f32.gmra.mxu0 %v272
        %v355 = vpop.f32.mrf.mxu0
        %v356 = vadd.f32 %v259, %v355
        %v357 = vpop.f32.mrf.mxu0
        %358 = vdwg.mxu0
        %v359 = vmul.f32 %v341, 0.1
        %v360 = vmul.f32 %v346, 0.1
        %v361 = vmul.f32 %v351, 0.1
        %v362 = vmul.f32 %v356, 0.1
        %v363 = vmax.f32 %v341, %v359
        %v364 = vmax.f32 %v346, %v360
        %v365 = vmax.f32 %v351, %v361
        %v366 = vmax.f32 %v356, %v362
        %v367 = vld [vmem:[%s3] sm:$0xff]
        %v368 = vld [vmem:[%s3 + $0x8] sm:$0xff]
        %v369 = vld [vmem:[%s3 + $0x10] sm:$0xff]
        %v370 = vld [vmem:[%s3 + $0x18] sm:$0xff]
        %v371 = vld [vmem:[%s3 + $0x20] sm:$0xff]
        %v372 = vld [vmem:[%s3 + $0x28] sm:$0xff]
        %v373 = vld [vmem:[%s3 + $0x30] sm:$0xff]
        %v374 = vld [vmem:[%s3 + $0x38] sm:$0xff]
        %v375 = vld [vmem:[%s3 + $0x40] sm:$0xff]
        %v376 = vld [vmem:[%s3 + $0x48] sm:$0xff]
        %v377 = vld [vmem:[%s3 + $0x50] sm:$0xff]
        %v378 = vld [vmem:[%s3 + $0x58] sm:$0xff]
        %v379 = vld [vmem:[%s3 + $0x60] sm:$0xff]
        %v380 = vld [vmem:[%s3 + $0x68] sm:$0xff]
        %v381 = vld [vmem:[%s3 + $0x70] sm:$0xff]
        %v382 = vld [vmem:[%s3 + $0x78] sm:$0xff]
        %v383 = vld [vmem:[%s4] sm:$0x1]
        %v385 = vlaneseq
        %v386 = vshrl.u32 %v385, 7
        %v387 = vsub.s32 0, %v386
        %v388 = vrot.slane %v383, %v387
        %390 = vmatprep.subr.mxu0 0.0
        %391 = vmatpush1.msra.mxu0 %v382
        %392 = vmatprep.subr.mxu0 0.0
        %393 = vmatpush1.msra.mxu0 %v381
        %394 = vmatprep.subr.mxu0 0.0
        %395 = vmatpush1.msra.mxu0 %v380
        %396 = vmatprep.subr.mxu0 0.0
        %397 = vmatpush1.msra.mxu0 %v379
        %398 = vmatprep.subr.mxu0 0.0
        %399 = vmatpush1.msra.mxu0 %v378
        %400 = vmatprep.subr.mxu0 0.0
        %401 = vmatpush1.msra.mxu0 %v377
        %402 = vmatprep.subr.mxu0 0.0
        %403 = vmatpush1.msra.mxu0 %v376
        %404 = vmatprep.subr.mxu0 0.0
        %405 = vmatpush1.msra.mxu0 %v375
        %406 = vmatprep.subr.mxu0 0.0
        %407 = vmatpush1.msra.mxu0 %v374
        %408 = vmatprep.subr.mxu0 0.0
        %409 = vmatpush1.msra.mxu0 %v373
        %410 = vmatprep.subr.mxu0 0.0
        %411 = vmatpush1.msra.mxu0 %v372
        %412 = vmatprep.subr.mxu0 0.0
        %413 = vmatpush1.msra.mxu0 %v371
        %414 = vmatprep.subr.mxu0 0.0
        %415 = vmatpush1.msra.mxu0 %v370
        %416 = vmatprep.subr.mxu0 0.0
        %417 = vmatpush1.msra.mxu0 %v369
        %418 = vmatprep.subr.mxu0 0.0
        %419 = vmatpush1.msra.mxu0 %v368
        %420 = vmatprep.subr.mxu0 0.0
        %421 = vmatpush1.msra.mxu0 %v367
        %422 = vmatprep.subr.mxu0 0.0
        %423 = vmatpush2.msra.mxu0 0.0
        %424 = vmatprep.subr.mxu0 0.0
        %425 = vmatpush2.msra.mxu0 0.0
        %426 = vmatprep.subr.mxu0 0.0
        %427 = vmatpush2.msra.mxu0 0.0
        %428 = vmatprep.subr.mxu0 0.0
        %429 = vmatpush2.msra.mxu0 0.0
        %430 = vmatprep.subr.mxu0 0.0
        %431 = vmatpush2.msra.mxu0 0.0
        %432 = vmatprep.subr.mxu0 0.0
        %433 = vmatpush2.msra.mxu0 0.0
        %434 = vmatprep.subr.mxu0 0.0
        %435 = vmatpush2.msra.mxu0 0.0
        %436 = vmatprep.subr.mxu0 0.0
        %437 = vmatpush2.msra.mxu0 0.0
        %438 = vmatprep.subr.mxu0 0.0
        %439 = vmatpush2.msra.mxu0 0.0
        %440 = vmatprep.subr.mxu0 0.0
        %441 = vmatpush2.msra.mxu0 0.0
        %442 = vmatprep.subr.mxu0 0.0
        %443 = vmatpush2.msra.mxu0 0.0
        %444 = vmatprep.subr.mxu0 0.0
        %445 = vmatpush2.msra.mxu0 0.0
        %446 = vmatprep.subr.mxu0 0.0
        %447 = vmatpush2.msra.mxu0 0.0
        %448 = vmatprep.subr.mxu0 0.0
        %449 = vmatpush2.msra.mxu0 0.0
        %450 = vmatprep.subr.mxu0 0.0
        %451 = vmatpush2.msra.mxu0 0.0
        %452 = vmatprep.subr.mxu0 0.0
        %453 = vmatpush2.msra.mxu0 0.0
        %454 = vmatprep.mubr.f32.mxu0 0.0
        %455 = vmatmul.mubr.f32.gmra.mxu0 %v363
        %v456 = vpop.f32.mrf.mxu0
        %v457 = vadd.f32 %v388, %v456
        %v458 = vpop.f32.mrf.mxu0
        %459 = vmatprep.mubr.f32.mxu0 0.0
        %460 = vmatmul.mubr.f32.gmra.mxu0 %v364
        %v461 = vpop.f32.mrf.mxu0
        %v462 = vadd.f32 %v388, %v461
        %v463 = vpop.f32.mrf.mxu0
        %464 = vmatprep.mubr.f32.mxu0 0.0
        %465 = vmatmul.mubr.f32.gmra.mxu0 %v365
        %v466 = vpop.f32.mrf.mxu0
        %v467 = vadd.f32 %v388, %v466
        %v468 = vpop.f32.mrf.mxu0
        %469 = vmatprep.mubr.f32.mxu0 0.0
        %470 = vmatmul.mubr.f32.gmra.mxu0 %v366
        %v471 = vpop.f32.mrf.mxu0
        %v472 = vadd.f32 %v388, %v471
        %v473 = vpop.f32.mrf.mxu0
        %474 = vdwg.mxu0
        %vm475 = vcmask 31744
        %476 = vst.msk [vmem:[%s226] sm:$0xff] %vm475, %v457
        %477 = vst.msk [vmem:[%s226 + $0x8] sm:$0xff] %vm475, %v462
        %478 = vst.msk [vmem:[%s226 + $0x10] sm:$0xff] %vm475, %v467
        %479 = vst.msk [vmem:[%s226 + $0x18] sm:$0xff] %vm475, %v472
        %s480 = sand.u32 %s134, 1
        %s481 = sand.u32 %s134, 1
        %s482 = smul.addr %s481, 32
        %s483 = scalar_lea.vmem [#allocation2], %s482
        // Predicated region
        $region41: #{tpu_custom_call.1} parent=39 // pred_check
          %p484 = pneg %p144
        $region42: #{tpu_custom_call.1} parent=39 // pred_check_branch
          %486 = sbr.rel (%p484) target = $region44
        $region43: #{tpu_custom_call.1} parent=39 // pred_region
          %s487 = smul.u32 4, %s16
          %s488 = ssub.s32 7, %s487
          %p489 = scmp.lt.s32.totalorder %s488, 4
          %s490 = scalar_select %p489, %s488, 4
          %s491 = smul.u32 128, %s490
          %p492 = scmp.ne.s32.totalorder 0, %s491
          %s493 = smul.addr %s487, 8
          %s494 = scalar_lea.vmem %s5, %s493
          // Predicated region
          $region45: #{tpu_custom_call.1} parent=43 // pred_check
            %p495 = pneg %p492
          $region46: #{tpu_custom_call.1} parent=43 // pred_check_branch
            %497 = sbr.rel (%p495) target = $region48
          $region47: #{tpu_custom_call.1} parent=43 // pred_region
            // Predicated region
            $region49: #{tpu_custom_call.1} parent=47 // pred_check
              _
            $region50: #{tpu_custom_call.1} parent=47 // pred_check_branch
              %499 = sbr.rel (0) target = $region52
            $region51: #{tpu_custom_call.1} parent=47 // pred_region
              // Predicated region
              $region71: #{tpu_custom_call.1} parent=51 // pred_check
                _
              $region72: #{tpu_custom_call.1} parent=51 // pred_check_branch
                %555 = sbr.rel (0) target = $region74
              $region73: #{tpu_custom_call.1} parent=51 // pred_region
                %s556 = sshrl.u32 %s490, 2
                // While loop
                $region75: #{tpu_custom_call.1} parent=73 // loop_pre_header
                  _
                $region76: #{tpu_custom_call.1} parent=73 // loop_header
                  %s558 = sphi 0, %s560
                  %p559 = scmp.ge.s32.totalorder %s558, %s556
                  %s563 = sphi 0, %s576
                  %s564 = sphi %s483, %s579
                  %s565 = sphi %s494, %s580
                $region77: #{tpu_custom_call.1} parent=73 // loop_header_branch
                  %562 = sbr.rel (%p559) target = $region81
                $region78: #{tpu_custom_call.1} parent=73 // loop_body
                  %v566 = vld [vmem:[%s564] sm:$0xff]
                  %567 = vst [vmem:[%s565] sm:$0xff] %v566
                  %v568 = vld [vmem:[%s564 + $0x8] sm:$0xff]
                  %569 = vst [vmem:[%s565 + $0x8] sm:$0xff] %v568
                  %v570 = vld [vmem:[%s564 + $0x10] sm:$0xff]
                  %571 = vst [vmem:[%s565 + $0x10] sm:$0xff] %v570
                  %v572 = vld [vmem:[%s564 + $0x18] sm:$0xff]
                  %573 = vst [vmem:[%s565 + $0x18] sm:$0xff] %v572
                  %s574 = sadd.s32 1, %s563
                  %p575 = scmp.ge.s32.totalorder %s574, %s556
                  %s576 = scalar_select %p575, 0, %s574
                  %s577 = smul.u32 %s576, 32
                  %s578 = smul.u32 %s576, 32
                  %s579 = scalar_lea.vmem %s483, %s577 [#allocation2]
                  %s580 = scalar_lea.vmem %s494, %s578
                $region79: #{tpu_custom_call.1} parent=73 // loop_footer
                  %s560 = sadd.s32 %s558, 1
                $region80: #{tpu_custom_call.1} parent=73 // loop_footer_branch
                  %557 = sbr.rel target = $region76
                $region81: #{tpu_custom_call.1} parent=73 // loop_exit
                  _
                %s581 = sshrl.u32 %s490, 2
                %s582 = sand.u32 %s490, 3
                %s583 = smul.u32 %s581, 4
                %s584 = smul.u32 8, %s583
                %s585 = scalar_lea.vmem %s483, %s584 [#allocation2]
                %s586 = smul.u32 8, %s583
                %s587 = scalar_lea.vmem %s494, %s586
                // While loop
                $region82: #{tpu_custom_call.1} parent=73 // loop_pre_header
                  _
                $region83: #{tpu_custom_call.1} parent=73 // loop_header
                  %s589 = sphi 0, %s591
                  %p590 = scmp.ge.s32.totalorder %s589, %s582
                  %s594 = sphi 0, %s601
                  %s595 = sphi %s585, %s604
                  %s596 = sphi %s587, %s605
                $region84: #{tpu_custom_call.1} parent=73 // loop_header_branch
                  %593 = sbr.rel (%p590) target = $region88
                $region85: #{tpu_custom_call.1} parent=73 // loop_body
                  %v597 = vld [vmem:[%s595] sm:$0xff]
                  %598 = vst [vmem:[%s596] sm:$0xff] %v597
                  %s599 = sadd.s32 1, %s594
                  %p600 = scmp.ge.s32.totalorder %s599, %s582
                  %s601 = scalar_select %p600, 0, %s599
                  %s602 = smul.u32 %s601, 8
                  %s603 = smul.u32 %s601, 8
                  %s604 = scalar_lea.vmem %s585, %s602 [#allocation2]
                  %s605 = scalar_lea.vmem %s587, %s603
                $region86: #{tpu_custom_call.1} parent=73 // loop_footer
                  %s591 = sadd.s32 %s589, 1
                $region87: #{tpu_custom_call.1} parent=73 // loop_footer_branch
                  %588 = sbr.rel target = $region83
                $region88: #{tpu_custom_call.1} parent=73 // loop_exit
                  _
              $region74: #{tpu_custom_call.1} parent=51 // pred_fallthru
                _
              // Predicated region
              $region89: #{tpu_custom_call.1} parent=51 // pred_check
                _
              $region90: #{tpu_custom_call.1} parent=51 // pred_check_branch
                %607 = sbr.rel target = $region92
              $region91: #{tpu_custom_call.1} parent=51 // pred_region
                _
              $region92: #{tpu_custom_call.1} parent=51 // pred_fallthru
                _
            $region52: #{tpu_custom_call.1} parent=47 // pred_fallthru
              _
            // Predicated region
            $region53: #{tpu_custom_call.1} parent=47 // pred_check
              _
            $region54: #{tpu_custom_call.1} parent=47 // pred_check_branch
              %501 = sbr.rel target = $region56
            $region55: #{tpu_custom_call.1} parent=47 // pred_region
              %s503 = ssub.s32 256, 1
              %s504 = sshrl.u32 %s490, 2
              // While loop
              $region57: #{tpu_custom_call.1} parent=55 // loop_pre_header
                _
              $region58: #{tpu_custom_call.1} parent=55 // loop_header
                %s506 = sphi 0, %s508
                %p507 = scmp.ge.s32.totalorder %s506, %s504
                %s511 = sphi 0, %s524
                %s512 = sphi %s483, %s527
                %s513 = sphi %s494, %s528
              $region59: #{tpu_custom_call.1} parent=55 // loop_header_branch
                %510 = sbr.rel (%p507) target = $region63
              $region60: #{tpu_custom_call.1} parent=55 // loop_body
                %v514 = vld [vmem:[%s512] sm:%s503]
                %515 = vst [vmem:[%s513] sm:%s503] %v514
                %v516 = vld [vmem:[%s512 + $0x8] sm:%s503]
                %517 = vst [vmem:[%s513 + $0x8] sm:%s503] %v516
                %v518 = vld [vmem:[%s512 + $0x10] sm:%s503]
                %519 = vst [vmem:[%s513 + $0x10] sm:%s503] %v518
                %v520 = vld [vmem:[%s512 + $0x18] sm:%s503]
                %521 = vst [vmem:[%s513 + $0x18] sm:%s503] %v520
                %s522 = sadd.s32 1, %s511
                %p523 = scmp.ge.s32.totalorder %s522, %s504
                %s524 = scalar_select %p523, 0, %s522
                %s525 = smul.u32 %s524, 32
                %s526 = smul.u32 %s524, 32
                %s527 = scalar_lea.vmem %s483, %s525 [#allocation2]
                %s528 = scalar_lea.vmem %s494, %s526
              $region61: #{tpu_custom_call.1} parent=55 // loop_footer
                %s508 = sadd.s32 %s506, 1
              $region62: #{tpu_custom_call.1} parent=55 // loop_footer_branch
                %505 = sbr.rel target = $region58
              $region63: #{tpu_custom_call.1} parent=55 // loop_exit
                _
              %s529 = sshrl.u32 %s490, 2
              %s530 = sand.u32 %s490, 3
              %s531 = smul.u32 %s529, 4
              %s532 = smul.u32 8, %s531
              %s533 = scalar_lea.vmem %s483, %s532 [#allocation2]
              %s534 = smul.u32 8, %s531
              %s535 = scalar_lea.vmem %s494, %s534
              // While loop
              $region64: #{tpu_custom_call.1} parent=55 // loop_pre_header
                _
              $region65: #{tpu_custom_call.1} parent=55 // loop_header
                %s537 = sphi 0, %s539
                %p538 = scmp.ge.s32.totalorder %s537, %s530
                %s542 = sphi 0, %s549
                %s543 = sphi %s533, %s552
                %s544 = sphi %s535, %s553
              $region66: #{tpu_custom_call.1} parent=55 // loop_header_branch
                %541 = sbr.rel (%p538) target = $region70
              $region67: #{tpu_custom_call.1} parent=55 // loop_body
                %v545 = vld [vmem:[%s543] sm:%s503]
                %546 = vst [vmem:[%s544] sm:%s503] %v545
                %s547 = sadd.s32 1, %s542
                %p548 = scmp.ge.s32.totalorder %s547, %s530
                %s549 = scalar_select %p548, 0, %s547
                %s550 = smul.u32 %s549, 8
                %s551 = smul.u32 %s549, 8
                %s552 = scalar_lea.vmem %s533, %s550 [#allocation2]
                %s553 = scalar_lea.vmem %s535, %s551
              $region68: #{tpu_custom_call.1} parent=55 // loop_footer
                %s539 = sadd.s32 %s537, 1
              $region69: #{tpu_custom_call.1} parent=55 // loop_footer_branch
                %536 = sbr.rel target = $region65
              $region70: #{tpu_custom_call.1} parent=55 // loop_exit
                _
            $region56: #{tpu_custom_call.1} parent=47 // pred_fallthru
              _
          $region48: #{tpu_custom_call.1} parent=43 // pred_fallthru
            _
          %608 = vnop
        $region44: #{tpu_custom_call.1} parent=39 // pred_fallthru
          _
      $region40: #{tpu_custom_call.1} parent=5 // pred_fallthru
        _
      %p609 = scmp.le.s32.totalorder 2, %s11
      // Predicated region
      $region93: #{tpu_custom_call.1} parent=5 // pred_check
        %p610 = pneg %p609
      $region94: #{tpu_custom_call.1} parent=5 // pred_check_branch
        %612 = sbr.rel (%p610) target = $region96
      $region95: #{tpu_custom_call.1} parent=5 // pred_region
        %s613 = ssub.s32 %s11, 2
        // Predicated region
        $region97: #{tpu_custom_call.1} parent=95 // pred_check
          %p614 = pneg %p150
        $region98: #{tpu_custom_call.1} parent=95 // pred_check_branch
          %616 = sbr.rel (%p614) target = $region100
        $region99: #{tpu_custom_call.1} parent=95 // pred_region
          %s617 = sand.u32 %s135, 1
          %s618 = sand.u32 %s135, 1
          %s619 = smul.addr %s618, 32
          %s620 = scalar_lea.vmem [#allocation2], %s619
        $region100: #{tpu_custom_call.1} parent=95 // pred_fallthru
          _
      $region96: #{tpu_custom_call.1} parent=5 // pred_fallthru
        _
    $region6: #{tpu_custom_call.1} parent=1 // loop_footer
      %s15 = sadd.s32 1, %s11
    $region7: #{tpu_custom_call.1} parent=1 // loop_footer_branch
      %10 = sbr.rel target = $region3
    $region8: #{tpu_custom_call.1} parent=1 // loop_exit
      _

</llo_original>
